<compile_context>
chip_gen: v5e
topology: v5e:2x2
jax: 0.10.0
libtpu: 0.0.40
codegen_flags: <defaults>
</compile_context>

<pallas_src>
import jax
import jax.numpy as jnp
from jax.experimental import pallas as pl
from jax.experimental.pallas import tpu as pltpu

_LANES = 128          # vreg lane width
_SUBLANES = 8         # vreg sublane count
_MAX_BLOCK_ROWS = 2048  # 2048 x 128 x 4B = 1 MiB per f32 block (VMEM-safe on v7x)


def _identity_kernel(x_ref, o_ref):
    # Pure passthrough: DummyBody.forward(x) == x
    o_ref[...] = x_ref[...]


def _pick_block_rows(rows, max_block_rows=_MAX_BLOCK_ROWS):
    """Largest divisor of `rows` that is a multiple of 8 and <= max_block_rows."""
    if rows % _SUBLANES != 0:
        return None
    cand = min(rows, max_block_rows)
    cand -= cand % _SUBLANES
    while cand >= _SUBLANES:
        if rows % cand == 0:
            return cand
        cand -= _SUBLANES
    return None


def _whole_block_copy(x):
    """Fallback: full-array single block (legal for any shape), aliased in->out."""
    return pl.pallas_call(
        _identity_kernel,
        out_shape=jax.ShapeDtypeStruct(x.shape, x.dtype),
        grid=(),
        in_specs=[pl.BlockSpec(x.shape, lambda: (0,) * x.ndim,
                               memory_space=pltpu.MemorySpace.VMEM)],
        out_specs=pl.BlockSpec(x.shape, lambda: (0,) * x.ndim,
                               memory_space=pltpu.MemorySpace.VMEM),
        input_output_aliases={0: 0},
    )(x)


def _lane_dense_tiled_copy(x2d, block_rows):
    """Lane-dense (rows, 128) copy, tiled along rows with a parallel grid."""
    rows, lanes = x2d.shape
    spec = pl.BlockSpec((block_rows, lanes), lambda i: (i, 0),
                        memory_space=pltpu.MemorySpace.VMEM)
    return pl.pallas_call(
        _identity_kernel,
        out_shape=jax.ShapeDtypeStruct((rows, lanes), x2d.dtype),
        grid=(rows // block_rows,),
        in_specs=[spec],
        out_specs=spec,
        input_output_aliases={0: 0},
        compiler_params=pltpu.CompilerParams(
            dimension_semantics=("parallel",)),
    )(x2d)


def dummy_body_forward(x):
    """Pallas implementation of DummyBody.forward (identity).

    Note: the mathematically optimal implementation is just `return x`; the
    Pallas path below is the cheapest on-device realization (aliased,
    lane-dense, pipelined copy).
    """
    n = x.size
    if n % _LANES == 0:
        rows = n // _LANES
        block_rows = _pick_block_rows(rows)
        if block_rows is not None:
            x2d = x.reshape(rows, _LANES)
            out = _lane_dense_tiled_copy(x2d, block_rows)
            return out.reshape(x.shape)
    # Small / non-lane-divisible shapes: single full-array block (overhead-
    # dominated regime; masked partial stores are irrelevant at this size).
    return _whole_block_copy(x)


class DummyBody:
    """Mirror of the PyTorch module: no parameters, identity forward."""

    def __init__(self, state_dim):
        self.latent_dim = state_dim

    def __call__(self, x):
        return dummy_body_forward(x)


if __name__ == "__main__":
    key = jax.random.PRNGKey(0)
    batch, state_dim = 2, 32
    x = jax.random.normal(key, (batch, state_dim), dtype=jnp.float32)
    x_host = jax.device_get(x)  # snapshot before the (aliased) kernel call

    body = DummyBody(state_dim)
    y = jax.block_until_ready(body(x))
    assert y.shape == x.shape and y.dtype == x.dtype
    assert jnp.array_equal(jax.device_get(y), x_host)

    # Also exercise the lane-dense, tiled, parallel-grid path.
    x_big = jax.random.normal(jax.random.PRNGKey(1), (4096, 128), dtype=jnp.float32)
    x_big_host = jax.device_get(x_big)
    y_big = jax.block_until_ready(dummy_body_forward(x_big))
    assert y_big.shape == x_big.shape and y_big.dtype == x_big.dtype
    assert jnp.array_equal(jax.device_get(y_big), x_big_host)

    print("KERNEL_OK")
</pallas_src>

<mosaic_0001>
module attributes {stable_mosaic.version = 11 : i64} {
  func.func @_identity_kernel(%arg0: memref<2x32xf32, #tpu.memory_space<vmem>>, %arg1: memref<2x32xf32, #tpu.memory_space<vmem>>) attributes {dimension_semantics = [], scalar_prefetch = 0 : i64, scratch_operands = 0 : i64, tpu.core_type = #tpu.core_type<tc>} {
    %c0 = arith.constant 0 : index
    %c0_0 = arith.constant 0 : index
    %0 = vector.load %arg0[%c0, %c0_0] : memref<2x32xf32, #tpu.memory_space<vmem>>, vector<2x32xf32>
    %c0_1 = arith.constant 0 : index
    %c0_2 = arith.constant 0 : index
    %1 = vector.load %arg1[%c0_1, %c0_2] : memref<2x32xf32, #tpu.memory_space<vmem>>, vector<2x32xf32>
    tpu.vector_store %arg1[%c0_1, %c0_2], %0 {strides = array<i32>} : memref<2x32xf32, #tpu.memory_space<vmem>>, vector<2x32xf32>,
    return
  }
}

</mosaic_0001>

<llo_original>
// kernel: tpu_custom_call.1
$region0: #{tpu_custom_call.1}
  #allocation0 [shape = 'u32[]', space=smem, size = 0x4, offset = 0x4, fixed_abs, tag = 'smem constant byte address 0x4 - core index']
  #allocation1 [shape = 'u32[72,128]{1,0:T(1,128)}', space=vmem, size = 0x9000, scoped, tag = 'internal scratch']
  %s0 = inlined_call_operand.hbm [shape: f32[2,32], index: 0, kind: input, shape index: {}, may-alias: {0,1}]
  %s1 = inlined_call_operand.hbm [shape: f32[2,32], index: 1, kind: output, shape index: {}, may-alias: {0,1}]
  %s2 = sld [smem:[#allocation0]]
  $region18: #{tpu_custom_call.1} parent=0
    _
  %s4 = ssub.s32 1, %s2
  %s5 = scalar_select 0, %s4, %s2
  $region1: #{tpu_custom_call.1} parent=0
    #allocation2 [shape = 'u8[1024]{0}', space=vmem, size = 0x400, scoped, tag = 'input window, operand 0, single buffered']
    #allocation3 [shape = 's32[1]{0}', space=sflag, size = 0x4, scoped, tag = 'scoped memory for tpu_custom_call.1']
    #allocation4 [shape = 's32[1]{0}', space=sflag, size = 0x4, scoped, tag = 'scoped memory for tpu_custom_call.1']
    #allocation5 [shape = 'u8[1024]{0}', space=vmem, size = 0x400, scoped, tag = 'output window, operand 0, single buffered']
    %6 = vsyncpa [#allocation3], 0
    %7 = vsyncpa [#allocation4], 0
    // Predicated region
    $region2: #{tpu_custom_call.1} parent=1 // pred_check
      _
    $region3: #{tpu_custom_call.1} parent=1 // pred_check_branch
      %9 = sbr.rel (0) target = $region5
    $region4: #{tpu_custom_call.1} parent=1 // pred_region
      %11 = vsyncadd [#allocation3], 0
      %s13 = sshll.u32 %s0, 4
      %s14 = int_to_ptr.hbm [resolvable:$true] %s13
      %s15 = sshll.u32 [#allocation2], 4
      %s16 = int_to_ptr.vmem [resolvable:$true] %s15
      %18 = dma.hbm_to_vmem [thread:$0]  %s14, 32, %s16, [#allocation3]
    $region5: #{tpu_custom_call.1} parent=1 // pred_fallthru
      _
    // Predicated region
    $region6: #{tpu_custom_call.1} parent=1 // pred_check
      _
    $region7: #{tpu_custom_call.1} parent=1 // pred_check_branch
      %20 = sbr.rel (0) target = $region9
    $region8: #{tpu_custom_call.1} parent=1 // pred_region
      %22 = dma.done [#allocation3], 32
    $region9: #{tpu_custom_call.1} parent=1 // pred_fallthru
      _
    %v23 = vld [vmem:[#allocation2] sm:$0x3]
    %vm24 = vcmask 254976
    %25 = vst.msk [vmem:[#allocation5] sm:$0x3] %vm24, %v23
    // Predicated region
    $region10: #{tpu_custom_call.1} parent=1 // pred_check
      _
    $region11: #{tpu_custom_call.1} parent=1 // pred_check_branch
      %27 = sbr.rel (0) target = $region13
    $region12: #{tpu_custom_call.1} parent=1 // pred_region
      %29 = vsyncadd [#allocation4], 0
      %s31 = sshll.u32 [#allocation5], 4
      %s32 = int_to_ptr.vmem [resolvable:$true] %s31
      %s33 = sshll.u32 %s1, 4
      %s34 = int_to_ptr.hbm [resolvable:$true] %s33
      %36 = dma.vmem_to_hbm [thread:$0]  %s32, 32, %s34, [#allocation4]
    $region13: #{tpu_custom_call.1} parent=1 // pred_fallthru
      _
    // Predicated region
    $region14: #{tpu_custom_call.1} parent=1 // pred_check
      _
    $region15: #{tpu_custom_call.1} parent=1 // pred_check_branch
      %38 = sbr.rel (0) target = $region17
    $region16: #{tpu_custom_call.1} parent=1 // pred_region
      %40 = dma.done [#allocation4], 32
    $region17: #{tpu_custom_call.1} parent=1 // pred_fallthru
      _
    %41 = vsyncpa [#allocation3], 1
    %42 = vsyncpa [#allocation4], 1

</llo_original>
